<compile_context>
chip_gen: v5e
topology: v5e:2x2
jax: 0.10.0
libtpu: 0.0.40
codegen_flags: <defaults>
</compile_context>

<pallas_src>
import jax
import jax.numpy as jnp
from jax.experimental import pallas as pl
from jax.experimental.pallas import tpu as pltpu

FWD = 2                       # the `fwd` constructor arg of MyDNN
D_IN = 62 * 3 * FWD           # 372
D_H1 = 256
D_H2 = 128
D_OUT = 62 * 3                # 186

LANE = 128
BF16_ROWS = 16                # bf16 packs 2 rows/sublane -> (16,128) min tile


def _round_up(x, m):
    return (x + m - 1) // m * m


D_OUT_PAD = _round_up(D_OUT, LANE)   # 256: unmasked lane-dense stores


def _mlp_kernel(x_ref, w1_ref, b1_ref, w2_ref, b2_ref, w3_ref, b3_ref, o_ref):
    # x block: (tb, 372) in the caller's dtype; cast to bf16 on-chip.
    # Weights are bf16 (in, out); biases f32 (1, out).
    x = x_ref[...].astype(jnp.bfloat16)
    # layer1 + ReLU (f32 accumulate on the MXU, bf16 back for the next matmul)
    h1 = jnp.dot(x, w1_ref[...], preferred_element_type=jnp.float32) + b1_ref[...]
    h1 = jnp.maximum(h1, 0.0).astype(jnp.bfloat16)
    # layer2 + ReLU
    h2 = jnp.dot(h1, w2_ref[...], preferred_element_type=jnp.float32) + b2_ref[...]
    h2 = jnp.maximum(h2, 0.0).astype(jnp.bfloat16)
    # layer3 (no activation); padded w3 cols / b3 entries are zero so the
    # padded output lanes are exact zeros.
    o = jnp.dot(h2, w3_ref[...], preferred_element_type=jnp.float32) + b3_ref[...]
    o_ref[...] = o.astype(o_ref.dtype)          # bf16 writeback


def _pick_tb(b_pad):
    if b_pad <= 512:
        return b_pad                            # single full tile
    # >= 2 tiles so v7x's two TensorCores both get work; cap at 1024 so the
    # double-buffered x/out tiles + f32 intermediates stay well inside v5e's
    # 16 MiB scoped-VMEM default (also fine for v6e/v7x).
    half = -(-b_pad // 2)
    return min(1024, _round_up(half, 256))


def mydnn_forward_padded(x, params, *, tb=None):
    """Fused 3-layer MLP.  Returns the padded (b_pad, 256) bf16 block;
    consumers needing the exact PyTorch shape should slice [:B, :186]
    (ideally fused into their own jit)."""
    B = x.shape[0]
    b_pad = _round_up(max(B, BF16_ROWS), BF16_ROWS)
    if b_pad != B:
        # tiny batch-only pad (< 16 rows); the feature dim is never padded.
        x = jnp.pad(x, ((0, b_pad - B), (0, 0)))
    if tb is None:
        tb = _pick_tb(b_pad)
    num_tiles = -(-b_pad // tb)                 # cdiv; last block may be partial

    w1, b1, w2, b2, w3, b3 = (params["w1"], params["b1"], params["w2"],
                              params["b2"], params["w3"], params["b3"])

    # Weights/biases: same block every grid step -> stay VMEM-resident.
    res = lambda shape: pl.BlockSpec(shape, lambda i: (0, 0))

    flops = 2 * b_pad * (D_IN * D_H1 + D_H1 * D_H2 + D_H2 * D_OUT_PAD)
    bytes_accessed = (b_pad * D_IN * x.dtype.itemsize
                      + b_pad * D_OUT_PAD * 2
                      + sum(int(p.size) * p.dtype.itemsize
                            for p in (w1, b1, w2, b2, w3, b3)))

    out = pl.pallas_call(
        _mlp_kernel,
        out_shape=jax.ShapeDtypeStruct((b_pad, D_OUT_PAD), jnp.bfloat16),
        grid=(num_tiles,),
        in_specs=[
            pl.BlockSpec((tb, D_IN), lambda i: (i, 0)),      # x tile (no pad)
            res((D_IN, D_H1)), res((1, D_H1)),
            res((D_H1, D_H2)), res((1, D_H2)),
            res((D_H2, D_OUT_PAD)), res((1, D_OUT_PAD)),
        ],
        out_specs=pl.BlockSpec((tb, D_OUT_PAD), lambda i: (i, 0)),
        compiler_params=pltpu.CompilerParams(
            dimension_semantics=("parallel",)),
        cost_estimate=pl.CostEstimate(flops=flops, transcendentals=0,
                                      bytes_accessed=bytes_accessed),
    )(x, w1, b1, w2, b2, w3, b3)
    return out


def mydnn_forward(x, params, *, tb=None):
    """PyTorch-equivalent signature: (B, 372) -> (B, 186) float32."""
    B = x.shape[0]
    out = mydnn_forward_padded(x, params, tb=tb)
    return out[:B, :D_OUT].astype(jnp.float32)


def init_params(key):
    """PyTorch-style nn.Linear init (U[-1/sqrt(fan_in), +]), then:
       - transpose to (in, out) for x @ W,
       - zero-pad w3 cols / b3 to D_OUT_PAD (w1 stays at K=372, unpadded),
       - cast weights to bf16 once (biases stay f32)."""
    ks = jax.random.split(key, 6)

    def linear(kw, kb, fan_in, fan_out):
        bound = 1.0 / jnp.sqrt(fan_in)
        w = jax.random.uniform(kw, (fan_in, fan_out), jnp.float32, -bound, bound)
        b = jax.random.uniform(kb, (1, fan_out), jnp.float32, -bound, bound)
        return w, b

    w1, b1 = linear(ks[0], ks[1], D_IN, D_H1)
    w2, b2 = linear(ks[2], ks[3], D_H1, D_H2)
    w3, b3 = linear(ks[4], ks[5], D_H2, D_OUT)

    w3 = jnp.pad(w3, ((0, 0), (0, D_OUT_PAD - D_OUT)))
    b3 = jnp.pad(b3, ((0, 0), (0, D_OUT_PAD - D_OUT)))

    return dict(
        w1=w1.astype(jnp.bfloat16), b1=b1,
        w2=w2.astype(jnp.bfloat16), b2=b2,
        w3=w3.astype(jnp.bfloat16), b3=b3,
    )


def mydnn_reference(x, p):
    """Pure-JAX reference mirroring the kernel's bf16/f32 mixed precision."""
    xb = x.astype(jnp.bfloat16)
    h1 = jnp.dot(xb, p["w1"], preferred_element_type=jnp.float32) + p["b1"]
    h1 = jnp.maximum(h1, 0.0).astype(jnp.bfloat16)
    h2 = jnp.dot(h1, p["w2"], preferred_element_type=jnp.float32) + p["b2"]
    h2 = jnp.maximum(h2, 0.0).astype(jnp.bfloat16)
    o = (jnp.dot(h2, p["w3"], preferred_element_type=jnp.float32)
         + p["b3"]).astype(jnp.bfloat16)
    return o[:, :D_OUT].astype(jnp.float32)


if __name__ == "__main__":
    key = jax.random.PRNGKey(0)
    k_x, k_p = jax.random.split(key)

    B = 8
    x = jax.random.normal(k_x, (B, D_IN), jnp.float32)
    params = init_params(k_p)

    out = mydnn_forward(x, params)
    out = jax.block_until_ready(out)

    ref = mydnn_reference(x, params)
    assert out.shape == (B, D_OUT), out.shape
    assert jnp.allclose(out, ref, atol=2e-2, rtol=2e-2), "mismatch vs reference"

    print("KERNEL_OK")
</pallas_src>

<mosaic_0001>
module attributes {stable_mosaic.version = 11 : i64} {
  func.func @_mlp_kernel(%arg0: i32, %arg1: memref<16x372xf32, #tpu.memory_space<vmem>>, %arg2: memref<372x256xbf16, #tpu.memory_space<vmem>>, %arg3: memref<1x256xf32, #tpu.memory_space<vmem>>, %arg4: memref<256x128xbf16, #tpu.memory_space<vmem>>, %arg5: memref<1x128xf32, #tpu.memory_space<vmem>>, %arg6: memref<128x256xbf16, #tpu.memory_space<vmem>>, %arg7: memref<1x256xf32, #tpu.memory_space<vmem>>, %arg8: memref<16x256xbf16, #tpu.memory_space<vmem>>) attributes {dimension_semantics = [#tpu.dimension_semantics<parallel>], iteration_bounds = array<i64: 1>, scalar_prefetch = 0 : i64, scratch_operands = 0 : i64, tpu.core_type = #tpu.core_type<tc>, window_params = [{transform_indices = @transform_0, window_bounds = array<i64: 16, 372>}, {pipeline_mode = #tpu.pipeline_mode<synchronous>, transform_indices = @transform_1, window_bounds = array<i64: 372, 256>}, {pipeline_mode = #tpu.pipeline_mode<synchronous>, transform_indices = @transform_2, window_bounds = array<i64: 1, 256>}, {pipeline_mode = #tpu.pipeline_mode<synchronous>, transform_indices = @transform_3, window_bounds = array<i64: 256, 128>}, {pipeline_mode = #tpu.pipeline_mode<synchronous>, transform_indices = @transform_4, window_bounds = array<i64: 1, 128>}, {pipeline_mode = #tpu.pipeline_mode<synchronous>, transform_indices = @transform_5, window_bounds = array<i64: 128, 256>}, {pipeline_mode = #tpu.pipeline_mode<synchronous>, transform_indices = @transform_6, window_bounds = array<i64: 1, 256>}, {transform_indices = @transform_7, window_bounds = array<i64: 16, 256>}]} {
    %c0 = arith.constant 0 : index
    %c0_0 = arith.constant 0 : index
    %0 = vector.load %arg1[%c0, %c0_0] : memref<16x372xf32, #tpu.memory_space<vmem>>, vector<16x372xf32>
    %1 = arith.truncf %0 : vector<16x372xf32> to vector<16x372xbf16>
    %c0_1 = arith.constant 0 : index
    %c0_2 = arith.constant 0 : index
    %2 = vector.load %arg2[%c0_1, %c0_2] : memref<372x256xbf16, #tpu.memory_space<vmem>>, vector<372x256xbf16>
    %cst = arith.constant dense<0.000000e+00> : vector<16x256xf32>
    %3 = tpu.matmul %1, %2, %cst {dimension_numbers = #tpu.dot_dimension_numbers<[1], [0], [0], [1], [0, 0, 1, 1], [], []>} : vector<16x372xbf16>, vector<372x256xbf16>, vector<16x256xf32> -> vector<16x256xf32>
    %c0_3 = arith.constant 0 : index
    %c0_4 = arith.constant 0 : index
    %4 = vector.load %arg3[%c0_3, %c0_4] : memref<1x256xf32, #tpu.memory_space<vmem>>, vector<1x256xf32>
    %5 = vector.broadcast %4 : vector<1x256xf32> to vector<16x256xf32>
    %6 = arith.addf %3, %5 : vector<16x256xf32>
    %cst_5 = arith.constant 0.000000e+00 : f32
    %7 = vector.broadcast %cst_5 : f32 to vector<16x256xf32>
    %8 = arith.maximumf %6, %7 : vector<16x256xf32>
    %9 = arith.truncf %8 : vector<16x256xf32> to vector<16x256xbf16>
    %c0_6 = arith.constant 0 : index
    %c0_7 = arith.constant 0 : index
    %10 = vector.load %arg4[%c0_6, %c0_7] : memref<256x128xbf16, #tpu.memory_space<vmem>>, vector<256x128xbf16>
    %cst_8 = arith.constant dense<0.000000e+00> : vector<16x128xf32>
    %11 = tpu.matmul %9, %10, %cst_8 {dimension_numbers = #tpu.dot_dimension_numbers<[1], [0], [0], [1], [0, 0, 1, 1], [], []>} : vector<16x256xbf16>, vector<256x128xbf16>, vector<16x128xf32> -> vector<16x128xf32>
    %c0_9 = arith.constant 0 : index
    %c0_10 = arith.constant 0 : index
    %12 = vector.load %arg5[%c0_9, %c0_10] : memref<1x128xf32, #tpu.memory_space<vmem>>, vector<1x128xf32>
    %13 = vector.broadcast %12 : vector<1x128xf32> to vector<16x128xf32>
    %14 = arith.addf %11, %13 : vector<16x128xf32>
    %cst_11 = arith.constant 0.000000e+00 : f32
    %15 = vector.broadcast %cst_11 : f32 to vector<16x128xf32>
    %16 = arith.maximumf %14, %15 : vector<16x128xf32>
    %17 = arith.truncf %16 : vector<16x128xf32> to vector<16x128xbf16>
    %c0_12 = arith.constant 0 : index
    %c0_13 = arith.constant 0 : index
    %18 = vector.load %arg6[%c0_12, %c0_13] : memref<128x256xbf16, #tpu.memory_space<vmem>>, vector<128x256xbf16>
    %cst_14 = arith.constant dense<0.000000e+00> : vector<16x256xf32>
    %19 = tpu.matmul %17, %18, %cst_14 {dimension_numbers = #tpu.dot_dimension_numbers<[1], [0], [0], [1], [0, 0, 1, 1], [], []>} : vector<16x128xbf16>, vector<128x256xbf16>, vector<16x256xf32> -> vector<16x256xf32>
    %c0_15 = arith.constant 0 : index
    %c0_16 = arith.constant 0 : index
    %20 = vector.load %arg7[%c0_15, %c0_16] : memref<1x256xf32, #tpu.memory_space<vmem>>, vector<1x256xf32>
    %21 = vector.broadcast %20 : vector<1x256xf32> to vector<16x256xf32>
    %22 = arith.addf %19, %21 : vector<16x256xf32>
    %23 = arith.truncf %22 : vector<16x256xf32> to vector<16x256xbf16>
    %c0_17 = arith.constant 0 : index
    %c0_18 = arith.constant 0 : index
    %24 = vector.load %arg8[%c0_17, %c0_18] : memref<16x256xbf16, #tpu.memory_space<vmem>>, vector<16x256xbf16>
    tpu.vector_store %arg8[%c0_17, %c0_18], %23 {strides = array<i32>} : memref<16x256xbf16, #tpu.memory_space<vmem>>, vector<16x256xbf16>,
    return
  }
  func.func @transform_0(%arg0: i32) -> (i32, i32) {
    %c0_i32 = arith.constant 0 : i32
    %c0_i32_0 = arith.constant 0 : i32
    return %arg0, %c0_i32 : i32, i32
  }
  func.func @transform_1(%arg0: i32) -> (i32, i32) {
    %c0_i32 = arith.constant 0 : i32
    %c0_i32_0 = arith.constant 0 : i32
    %c0_i32_1 = arith.constant 0 : i32
    return %c0_i32, %c0_i32_0 : i32, i32
  }
  func.func @transform_2(%arg0: i32) -> (i32, i32) {
    %c0_i32 = arith.constant 0 : i32
    %c0_i32_0 = arith.constant 0 : i32
    %c0_i32_1 = arith.constant 0 : i32
    return %c0_i32, %c0_i32_0 : i32, i32
  }
  func.func @transform_3(%arg0: i32) -> (i32, i32) {
    %c0_i32 = arith.constant 0 : i32
    %c0_i32_0 = arith.constant 0 : i32
    %c0_i32_1 = arith.constant 0 : i32
    return %c0_i32, %c0_i32_0 : i32, i32
  }
  func.func @transform_4(%arg0: i32) -> (i32, i32) {
    %c0_i32 = arith.constant 0 : i32
    %c0_i32_0 = arith.constant 0 : i32
    %c0_i32_1 = arith.constant 0 : i32
    return %c0_i32, %c0_i32_0 : i32, i32
  }
  func.func @transform_5(%arg0: i32) -> (i32, i32) {
    %c0_i32 = arith.constant 0 : i32
    %c0_i32_0 = arith.constant 0 : i32
    %c0_i32_1 = arith.constant 0 : i32
    return %c0_i32, %c0_i32_0 : i32, i32
  }
  func.func @transform_6(%arg0: i32) -> (i32, i32) {
    %c0_i32 = arith.constant 0 : i32
    %c0_i32_0 = arith.constant 0 : i32
    %c0_i32_1 = arith.constant 0 : i32
    return %c0_i32, %c0_i32_0 : i32, i32
  }
  func.func @transform_7(%arg0: i32) -> (i32, i32) {
    %c0_i32 = arith.constant 0 : i32
    %c0_i32_0 = arith.constant 0 : i32
    return %arg0, %c0_i32 : i32, i32
  }
}

</mosaic_0001>

<llo_original>
// kernel: tpu_custom_call.1
$region0: #{tpu_custom_call.1}
  #allocation0 [shape = 'u32[]', space=smem, size = 0x4, offset = 0x4, fixed_abs, tag = 'smem constant byte address 0x4 - core index']
  #allocation1 [shape = 'u32[72,128]{1,0:T(1,128)}', space=vmem, size = 0x9000, scoped, tag = 'internal scratch']
  %s0 = inlined_call_operand.hbm [shape: f32[16,372], index: 0, kind: input, shape index: {}]
  %s1 = inlined_call_operand.hbm [shape: bf16[372,256], index: 1, kind: input, shape index: {}]
  %s2 = inlined_call_operand.hbm [shape: f32[1,256], index: 2, kind: input, shape index: {}]
  %s3 = inlined_call_operand.hbm [shape: bf16[256,128], index: 3, kind: input, shape index: {}]
  %s4 = inlined_call_operand.vmem [shape: f32[1,128], index: 4, kind: input, shape index: {}]
  %s5 = inlined_call_operand.hbm [shape: bf16[128,256], index: 5, kind: input, shape index: {}]
  %s6 = inlined_call_operand.vmem [shape: f32[1,256], index: 6, kind: input, shape index: {}]
  %s7 = inlined_call_operand.hbm [shape: bf16[16,256], index: 7, kind: output, shape index: {}]
  %s8 = sld [smem:[#allocation0]]
  $region58: #{tpu_custom_call.1} parent=0
    _
  %s10 = ssub.s32 1, %s8
  %s11 = scalar_select 0, %s10, %s8
  $region1: #{tpu_custom_call.1} parent=0
    #allocation2 [shape = 'u8[24576]{0}', space=vmem, size = 0x6000, scoped, tag = 'input window, operand 0, single buffered']
    #allocation3 [shape = 's32[1]{0}', space=sflag, size = 0x4, scoped, tag = 'scoped memory for tpu_custom_call.1']
    #allocation4 [shape = 's32[1]{0}', space=sflag, size = 0x4, scoped, tag = 'scoped memory for tpu_custom_call.1']
    #allocation5 [shape = 'u8[192512]{0}', space=vmem, size = 0x2f000, scoped, tag = 'input window, operand 1, single buffered']
    #allocation6 [shape = 's32[1]{0}', space=sflag, size = 0x4, scoped, tag = 'scoped memory for tpu_custom_call.1']
    #allocation7 [shape = 'u8[1024]{0}', space=vmem, size = 0x400, scoped, tag = 'input window, operand 2, single buffered']
    #allocation8 [shape = 'u8[65536]{0}', space=vmem, size = 0x10000, scoped, tag = 'input window, operand 3, single buffered']
    #allocation9 [shape = 's32[1]{0}', space=sflag, size = 0x4, scoped, tag = 'scoped memory for tpu_custom_call.1']
    #allocation10 [shape = 'u8[65536]{0}', space=vmem, size = 0x10000, scoped, tag = 'input window, operand 5, single buffered']
    #allocation11 [shape = 'u8[8192]{0}', space=vmem, size = 0x2000, scoped, tag = 'output window, operand 0, single buffered']
    %12 = vsyncpa [#allocation3], 0
    %13 = vsyncpa [#allocation6], 0
    %14 = vsyncpa [#allocation9], 0
    %15 = vsyncpa [#allocation4], 0
    // Predicated region
    $region2: #{tpu_custom_call.1} parent=1 // pred_check
      _
    $region3: #{tpu_custom_call.1} parent=1 // pred_check_branch
      %17 = sbr.rel (0) target = $region5
    $region4: #{tpu_custom_call.1} parent=1 // pred_region
      %19 = vsyncadd [#allocation3], 0
      %s20 = sshll.u32 %s0, 4
      %s21 = int_to_ptr.hbm [resolvable:$true] %s20
      %s22 = sshll.u32 [#allocation2], 4
      %s23 = int_to_ptr.vmem [resolvable:$true] %s22
      %28 = dma.hbm_to_vmem [thread:$0]  %s21, 768, %s23, [#allocation3], 384, 384, 24
    $region5: #{tpu_custom_call.1} parent=1 // pred_fallthru
      _
    // Predicated region
    $region6: #{tpu_custom_call.1} parent=1 // pred_check
      _
    $region7: #{tpu_custom_call.1} parent=1 // pred_check_branch
      %30 = sbr.rel (0) target = $region9
    $region8: #{tpu_custom_call.1} parent=1 // pred_region
      %32 = vsyncadd [#allocation6], 0
      %s33 = sshll.u32 %s1, 4
      %s34 = int_to_ptr.hbm [resolvable:$true] %s33
      %s35 = sshll.u32 [#allocation5], 4
      %s36 = int_to_ptr.vmem [resolvable:$true] %s35
      %41 = dma.hbm_to_vmem [thread:$0]  %s34, 6016, %s36, [#allocation6], 128, 128, 8
    $region9: #{tpu_custom_call.1} parent=1 // pred_fallthru
      _
    // Predicated region
    $region10: #{tpu_custom_call.1} parent=1 // pred_check
      _
    $region11: #{tpu_custom_call.1} parent=1 // pred_check_branch
      %43 = sbr.rel (0) target = $region13
    $region12: #{tpu_custom_call.1} parent=1 // pred_region
      %45 = vsyncadd [#allocation6], 0
      %s47 = sshll.u32 %s2, 4
      %s48 = int_to_ptr.hbm [resolvable:$true] %s47
      %s49 = sshll.u32 [#allocation7], 4
      %s50 = int_to_ptr.vmem [resolvable:$true] %s49
      %52 = dma.hbm_to_vmem [thread:$0]  %s48, 32, %s50, [#allocation6]
    $region13: #{tpu_custom_call.1} parent=1 // pred_fallthru
      _
    // Predicated region
    $region14: #{tpu_custom_call.1} parent=1 // pred_check
      _
    $region15: #{tpu_custom_call.1} parent=1 // pred_check_branch
      %54 = sbr.rel (0) target = $region17
    $region16: #{tpu_custom_call.1} parent=1 // pred_region
      %56 = vsyncadd [#allocation9], 0
      %s57 = sshll.u32 %s3, 4
      %s58 = int_to_ptr.hbm [resolvable:$true] %s57
      %s59 = sshll.u32 [#allocation8], 4
      %s60 = int_to_ptr.vmem [resolvable:$true] %s59
      %65 = dma.hbm_to_vmem [thread:$0]  %s58, 2048, %s60, [#allocation9], 64, 64, 4
    $region17: #{tpu_custom_call.1} parent=1 // pred_fallthru
      _
    // Predicated region
    $region18: #{tpu_custom_call.1} parent=1 // pred_check
      _
    $region19: #{tpu_custom_call.1} parent=1 // pred_check_branch
      %67 = sbr.rel (0) target = $region21
    $region20: #{tpu_custom_call.1} parent=1 // pred_region
      _
    $region21: #{tpu_custom_call.1} parent=1 // pred_fallthru
      _
    // Predicated region
    $region22: #{tpu_custom_call.1} parent=1 // pred_check
      _
    $region23: #{tpu_custom_call.1} parent=1 // pred_check_branch
      %69 = sbr.rel (0) target = $region25
    $region24: #{tpu_custom_call.1} parent=1 // pred_region
      %71 = vsyncadd [#allocation9], 0
      %s72 = sshll.u32 %s5, 4
      %s73 = int_to_ptr.hbm [resolvable:$true] %s72
      %s74 = sshll.u32 [#allocation10], 4
      %s75 = int_to_ptr.vmem [resolvable:$true] %s74
      %80 = dma.hbm_to_vmem [thread:$0]  %s73, 2048, %s75, [#allocation9], 128, 128, 8
    $region25: #{tpu_custom_call.1} parent=1 // pred_fallthru
      _
    // Predicated region
    $region26: #{tpu_custom_call.1} parent=1 // pred_check
      _
    $region27: #{tpu_custom_call.1} parent=1 // pred_check_branch
      %82 = sbr.rel (0) target = $region29
    $region28: #{tpu_custom_call.1} parent=1 // pred_region
      _
    $region29: #{tpu_custom_call.1} parent=1 // pred_fallthru
      _
    // Predicated region
    $region30: #{tpu_custom_call.1} parent=1 // pred_check
      _
    $region31: #{tpu_custom_call.1} parent=1 // pred_check_branch
      %84 = sbr.rel (0) target = $region33
    $region32: #{tpu_custom_call.1} parent=1 // pred_region
      %86 = dma.done [#allocation3], 768
    $region33: #{tpu_custom_call.1} parent=1 // pred_fallthru
      _
    // Predicated region
    $region34: #{tpu_custom_call.1} parent=1 // pred_check
      _
    $region35: #{tpu_custom_call.1} parent=1 // pred_check_branch
      %88 = sbr.rel (0) target = $region37
    $region36: #{tpu_custom_call.1} parent=1 // pred_region
      %90 = dma.done [#allocation6], 6016
    $region37: #{tpu_custom_call.1} parent=1 // pred_fallthru
      _
    // Predicated region
    $region38: #{tpu_custom_call.1} parent=1 // pred_check
      _
    $region39: #{tpu_custom_call.1} parent=1 // pred_check_branch
      %92 = sbr.rel (0) target = $region41
    $region40: #{tpu_custom_call.1} parent=1 // pred_region
      %94 = dma.done [#allocation6], 32
    $region41: #{tpu_custom_call.1} parent=1 // pred_fallthru
      _
    // Predicated region
    $region42: #{tpu_custom_call.1} parent=1 // pred_check
      _
    $region43: #{tpu_custom_call.1} parent=1 // pred_check_branch
      %96 = sbr.rel (0) target = $region45
    $region44: #{tpu_custom_call.1} parent=1 // pred_region
      %98 = dma.done [#allocation9], 2048
    $region45: #{tpu_custom_call.1} parent=1 // pred_fallthru
      _
    // Predicated region
    $region46: #{tpu_custom_call.1} parent=1 // pred_check
      _
    $region47: #{tpu_custom_call.1} parent=1 // pred_check_branch
      %100 = sbr.rel (0) target = $region49
    $region48: #{tpu_custom_call.1} parent=1 // pred_region
      %102 = dma.done [#allocation9], 2048
    $region49: #{tpu_custom_call.1} parent=1 // pred_fallthru
      _
    %v103 = vld [vmem:[#allocation2] sm:$0xff]
    %v104 = vld [vmem:[#allocation2 + $0x8] sm:$0xff]
    %v105 = vld [vmem:[#allocation2 + $0x10] sm:$0xff]
    %v106 = vld [vmem:[#allocation2 + $0x18] sm:$0xff]
    %v107 = vld [vmem:[#allocation2 + $0x20] sm:$0xff]
    %v108 = vld [vmem:[#allocation2 + $0x28] sm:$0xff]
    %v109 = vpack.c.bf16 %v106, %v103
    %v110 = vpack.c.bf16 %v107, %v104
    %v111 = vpack.c.bf16 %v108, %v105
    %v112 = vld [vmem:[#allocation5] sm:$0xff]
    %v113 = vld [vmem:[#allocation5 + $0x8] sm:$0xff]
    %v114 = vld [vmem:[#allocation5 + $0x10] sm:$0xff]
    %v115 = vld [vmem:[#allocation5 + $0x18] sm:$0xff]
    %v116 = vld [vmem:[#allocation5 + $0x20] sm:$0xff]
    %v117 = vld [vmem:[#allocation5 + $0x28] sm:$0xff]
    %v118 = vld [vmem:[#allocation5 + $0x30] sm:$0xff]
    %v119 = vld [vmem:[#allocation5 + $0x38] sm:$0xff]
    %v120 = vld [vmem:[#allocation5 + $0x40] sm:$0xff]
    %v121 = vld [vmem:[#allocation5 + $0x48] sm:$0xff]
    %v122 = vld [vmem:[#allocation5 + $0x50] sm:$0xff]
    %v123 = vld [vmem:[#allocation5 + $0x58] sm:$0xff]
    %v124 = vld [vmem:[#allocation5 + $0x60] sm:$0xff]
    %v125 = vld [vmem:[#allocation5 + $0x68] sm:$0xff]
    %v126 = vld [vmem:[#allocation5 + $0x70] sm:$0xff]
    %v127 = vld [vmem:[#allocation5 + $0x78] sm:$0xff]
    %v128 = vld [vmem:[#allocation5 + $0x80] sm:$0xff]
    %v129 = vld [vmem:[#allocation5 + $0x88] sm:$0xff]
    %v130 = vld [vmem:[#allocation5 + $0x90] sm:$0xff]
    %v131 = vld [vmem:[#allocation5 + $0x98] sm:$0xff]
    %v132 = vld [vmem:[#allocation5 + $0xa0] sm:$0xff]
    %v133 = vld [vmem:[#allocation5 + $0xa8] sm:$0xff]
    %v134 = vld [vmem:[#allocation5 + $0xb0] sm:$0xff]
    %v135 = vld [vmem:[#allocation5 + $0xb8] sm:$0xff]
    %v136 = vld [vmem:[#allocation5 + $0xc0] sm:$0xff]
    %v137 = vld [vmem:[#allocation5 + $0xc8] sm:$0xff]
    %v138 = vld [vmem:[#allocation5 + $0xd0] sm:$0xff]
    %v139 = vld [vmem:[#allocation5 + $0xd8] sm:$0xff]
    %v140 = vld [vmem:[#allocation5 + $0xe0] sm:$0xff]
    %v141 = vld [vmem:[#allocation5 + $0xe8] sm:$0xff]
    %v142 = vld [vmem:[#allocation5 + $0xf0] sm:$0xff]
    %v143 = vld [vmem:[#allocation5 + $0xf8] sm:$0xff]
    %v144 = vld [vmem:[#allocation5 + $0x100] sm:$0xff]
    %v145 = vld [vmem:[#allocation5 + $0x108] sm:$0xff]
    %v146 = vld [vmem:[#allocation5 + $0x110] sm:$0xff]
    %v147 = vld [vmem:[#allocation5 + $0x118] sm:$0xff]
    %v148 = vld [vmem:[#allocation5 + $0x120] sm:$0xff]
    %v149 = vld [vmem:[#allocation5 + $0x128] sm:$0xff]
    %v150 = vld [vmem:[#allocation5 + $0x130] sm:$0xff]
    %v151 = vld [vmem:[#allocation5 + $0x138] sm:$0xff]
    %v152 = vld [vmem:[#allocation5 + $0x140] sm:$0xff]
    %v153 = vld [vmem:[#allocation5 + $0x148] sm:$0xff]
    %v154 = vld [vmem:[#allocation5 + $0x150] sm:$0xff]
    %v155 = vld [vmem:[#allocation5 + $0x158] sm:$0xff]
    %v156 = vld [vmem:[#allocation5 + $0x160] sm:$0xff]
    %v157 = vld [vmem:[#allocation5 + $0x168] sm:$0xff]
    %v158 = vld [vmem:[#allocation5 + $0x170] sm:$0x33]
    %v159 = vld [vmem:[#allocation7] sm:$0x3]
    %v161 = vperm.slane %v159, 0
    %v162 = vperm.slane %v159, 1
    %v212 = vunpack.c.l.b16 %v112
    %v213 = vunpack.c.h.b16 %v112
    %v214 = vunpack.c.l.b16 %v113
    %v215 = vunpack.c.h.b16 %v113
    %v216 = vunpack.c.l.b16 %v114
    %v217 = vunpack.c.h.b16 %v114
    %v218 = vunpack.c.l.b16 %v115
    %v219 = vunpack.c.h.b16 %v115
    %v220 = vunpack.c.l.b16 %v116
    %v221 = vunpack.c.h.b16 %v116
    %v222 = vunpack.c.l.b16 %v117
    %v223 = vunpack.c.h.b16 %v117
    %v224 = vunpack.c.l.b16 %v118
    %v225 = vunpack.c.h.b16 %v118
    %v226 = vunpack.c.l.b16 %v119
    %v227 = vunpack.c.h.b16 %v119
    %v228 = vunpack.c.l.b16 %v120
    %v229 = vunpack.c.h.b16 %v120
    %v230 = vunpack.c.l.b16 %v121
    %v231 = vunpack.c.h.b16 %v121
    %v232 = vunpack.c.l.b16 %v122
    %v233 = vunpack.c.h.b16 %v122
    %v234 = vunpack.c.l.b16 %v123
    %v235 = vunpack.c.h.b16 %v123
    %v236 = vunpack.c.l.b16 %v124
    %v237 = vunpack.c.h.b16 %v124
    %v238 = vunpack.c.l.b16 %v125
    %v239 = vunpack.c.h.b16 %v125
    %v240 = vunpack.c.l.b16 %v126
    %v241 = vunpack.c.h.b16 %v126
    %v242 = vunpack.c.l.b16 %v127
    %v243 = vunpack.c.h.b16 %v127
    %v244 = vunpack.c.l.b16 %v128
    %v245 = vunpack.c.h.b16 %v128
    %v246 = vunpack.c.l.b16 %v129
    %v247 = vunpack.c.h.b16 %v129
    %v248 = vunpack.c.l.b16 %v130
    %v249 = vunpack.c.h.b16 %v130
    %v250 = vunpack.c.l.b16 %v131
    %v251 = vunpack.c.h.b16 %v131
    %v252 = vunpack.c.l.b16 %v132
    %v253 = vunpack.c.h.b16 %v132
    %v254 = vunpack.c.l.b16 %v133
    %v255 = vunpack.c.h.b16 %v133
    %v256 = vunpack.c.l.b16 %v134
    %v257 = vunpack.c.h.b16 %v134
    %v258 = vunpack.c.l.b16 %v135
    %v259 = vunpack.c.h.b16 %v135
    %v260 = vunpack.c.l.b16 %v136
    %v261 = vunpack.c.h.b16 %v136
    %v262 = vunpack.c.l.b16 %v137
    %v263 = vunpack.c.h.b16 %v137
    %v264 = vunpack.c.l.b16 %v138
    %v265 = vunpack.c.h.b16 %v138
    %v266 = vunpack.c.l.b16 %v139
    %v267 = vunpack.c.h.b16 %v139
    %v268 = vunpack.c.l.b16 %v140
    %v269 = vunpack.c.h.b16 %v140
    %v270 = vunpack.c.l.b16 %v141
    %v271 = vunpack.c.h.b16 %v141
    %v272 = vunpack.c.l.b16 %v142
    %v273 = vunpack.c.h.b16 %v142
    %v274 = vunpack.c.l.b16 %v143
    %v275 = vunpack.c.h.b16 %v143
    %v276 = vunpack.c.l.b16 %v144
    %v277 = vunpack.c.h.b16 %v144
    %v278 = vunpack.c.l.b16 %v145
    %v279 = vunpack.c.h.b16 %v145
    %v280 = vunpack.c.l.b16 %v146
    %v281 = vunpack.c.h.b16 %v146
    %v282 = vunpack.c.l.b16 %v147
    %v283 = vunpack.c.h.b16 %v147
    %v284 = vunpack.c.l.b16 %v148
    %v285 = vunpack.c.h.b16 %v148
    %v286 = vunpack.c.l.b16 %v149
    %v287 = vunpack.c.h.b16 %v149
    %v288 = vunpack.c.l.b16 %v150
    %v289 = vunpack.c.h.b16 %v150
    %v290 = vunpack.c.l.b16 %v151
    %v291 = vunpack.c.h.b16 %v151
    %v292 = vunpack.c.l.b16 %v152
    %v293 = vunpack.c.h.b16 %v152
    %v294 = vunpack.c.l.b16 %v153
    %v295 = vunpack.c.h.b16 %v153
    %v296 = vunpack.c.l.b16 %v154
    %v297 = vunpack.c.h.b16 %v154
    %v298 = vunpack.c.l.b16 %v155
    %v299 = vunpack.c.h.b16 %v155
    %v300 = vunpack.c.l.b16 %v156
    %v301 = vunpack.c.h.b16 %v156
    %v302 = vunpack.c.l.b16 %v157
    %v303 = vunpack.c.h.b16 %v157
    %v304 = vunpack.c.l.b16 %v158
    %v305 = vunpack.c.h.b16 %v158
    %v306 = vpack.c.b16 %v214, %v212
    %v307 = vpack.c.b16 %v215, %v213
    %v308 = vpack.c.b16 %v218, %v216
    %v309 = vpack.c.b16 %v219, %v217
    %v310 = vpack.c.b16 %v222, %v220
    %v311 = vpack.c.b16 %v223, %v221
    %v312 = vpack.c.b16 %v226, %v224
    %v313 = vpack.c.b16 %v227, %v225
    %v314 = vpack.c.b16 %v230, %v228
    %v315 = vpack.c.b16 %v231, %v229
    %v316 = vpack.c.b16 %v234, %v232
    %v317 = vpack.c.b16 %v235, %v233
    %v318 = vpack.c.b16 %v238, %v236
    %v319 = vpack.c.b16 %v239, %v237
    %v320 = vpack.c.b16 %v242, %v240
    %v321 = vpack.c.b16 %v243, %v241
    %v322 = vpack.c.b16 %v246, %v244
    %v323 = vpack.c.b16 %v247, %v245
    %v324 = vpack.c.b16 %v250, %v248
    %v325 = vpack.c.b16 %v251, %v249
    %v326 = vpack.c.b16 %v254, %v252
    %v327 = vpack.c.b16 %v255, %v253
    %v328 = vpack.c.b16 %v258, %v256
    %v329 = vpack.c.b16 %v259, %v257
    %v330 = vpack.c.b16 %v262, %v260
    %v331 = vpack.c.b16 %v263, %v261
    %v332 = vpack.c.b16 %v266, %v264
    %v333 = vpack.c.b16 %v267, %v265
    %v334 = vpack.c.b16 %v270, %v268
    %v335 = vpack.c.b16 %v271, %v269
    %v336 = vpack.c.b16 %v274, %v272
    %v337 = vpack.c.b16 %v275, %v273
    %v338 = vpack.c.b16 %v278, %v276
    %v339 = vpack.c.b16 %v279, %v277
    %v340 = vpack.c.b16 %v282, %v280
    %v341 = vpack.c.b16 %v283, %v281
    %v342 = vpack.c.b16 %v286, %v284
    %v343 = vpack.c.b16 %v287, %v285
    %v344 = vpack.c.b16 %v290, %v288
    %v345 = vpack.c.b16 %v291, %v289
    %v346 = vpack.c.b16 %v294, %v292
    %v347 = vpack.c.b16 %v295, %v293
    %v348 = vpack.c.b16 %v298, %v296
    %v349 = vpack.c.b16 %v299, %v297
    %v350 = vpack.c.b16 %v302, %v300
    %v351 = vpack.c.b16 %v303, %v301
    %v352 = vpack.c.b16 %v304, %v304
    %v353 = vpack.c.b16 %v305, %v305
    %vm400 = vcmask 949248
    %v402 = vsel %vm400, %v111, 0
    %vm404 = vcmask 1041408
    %v406 = vsel %vm404, %v352, 0
    %v409 = vsel %vm404, %v353, 0
    %411 = vmatpush.bf16.msra.mxu0 %v320
    %412 = vmatpush.bf16.msra.mxu0 %v318
    %413 = vmatpush.bf16.msra.mxu0 %v316
    %414 = vmatpush.bf16.msra.mxu0 %v314
    %415 = vmatpush.bf16.msra.mxu0 %v312
    %416 = vmatpush.bf16.msra.mxu0 %v310
    %417 = vmatpush.bf16.msra.mxu0 %v308
    %418 = vmatpush.bf16.msra.mxu0 %v306
    %419 = vmatmul.bf16.gmra.mxu0 %v109
    %v420 = vpop.f32.mrf.mxu0
    %v421 = vadd.f32 %v161, %v420
    %v422 = vpop.f32.mrf.mxu0
    %v423 = vadd.f32 %v161, %v422
    %424 = vdwg.mxu0
    %425 = vmatpush.bf16.msra.mxu0 %v336
    %426 = vmatpush.bf16.msra.mxu0 %v334
    %427 = vmatpush.bf16.msra.mxu0 %v332
    %428 = vmatpush.bf16.msra.mxu0 %v330
    %429 = vmatpush.bf16.msra.mxu0 %v328
    %430 = vmatpush.bf16.msra.mxu0 %v326
    %431 = vmatpush.bf16.msra.mxu0 %v324
    %432 = vmatpush.bf16.msra.mxu0 %v322
    %433 = vmatmul.bf16.gmra.mxu0 %v110
    %v434 = vpop.f32.mrf.mxu0
    %v435 = vadd.f32 %v421, %v434
    %v436 = vpop.f32.mrf.mxu0
    %v437 = vadd.f32 %v423, %v436
    %438 = vdwg.mxu0
    %439 = vmatpush.bf16.msra.mxu0 %v406
    %440 = vmatpush.bf16.msra.mxu0 %v350
    %441 = vmatpush.bf16.msra.mxu0 %v348
    %442 = vmatpush.bf16.msra.mxu0 %v346
    %443 = vmatpush.bf16.msra.mxu0 %v344
    %444 = vmatpush.bf16.msra.mxu0 %v342
    %445 = vmatpush.bf16.msra.mxu0 %v340
    %446 = vmatpush.bf16.msra.mxu0 %v338
    %447 = vmatmul.bf16.gmra.mxu0 %v402
    %v448 = vpop.f32.mrf.mxu0
    %v449 = vadd.f32 %v435, %v448
    %v450 = vpop.f32.mrf.mxu0
    %v451 = vadd.f32 %v437, %v450
    %452 = vdwg.mxu0
    %453 = vmatpush.bf16.msra.mxu0 %v321
    %454 = vmatpush.bf16.msra.mxu0 %v319
    %455 = vmatpush.bf16.msra.mxu0 %v317
    %456 = vmatpush.bf16.msra.mxu0 %v315
    %457 = vmatpush.bf16.msra.mxu0 %v313
    %458 = vmatpush.bf16.msra.mxu0 %v311
    %459 = vmatpush.bf16.msra.mxu0 %v309
    %460 = vmatpush.bf16.msra.mxu0 %v307
    %461 = vmatmul.bf16.gmra.mxu0 %v109
    %v462 = vpop.f32.mrf.mxu0
    %v463 = vadd.f32 %v162, %v462
    %v464 = vpop.f32.mrf.mxu0
    %v465 = vadd.f32 %v162, %v464
    %466 = vdwg.mxu0
    %467 = vmatpush.bf16.msra.mxu0 %v337
    %468 = vmatpush.bf16.msra.mxu0 %v335
    %469 = vmatpush.bf16.msra.mxu0 %v333
    %470 = vmatpush.bf16.msra.mxu0 %v331
    %471 = vmatpush.bf16.msra.mxu0 %v329
    %472 = vmatpush.bf16.msra.mxu0 %v327
    %473 = vmatpush.bf16.msra.mxu0 %v325
    %474 = vmatpush.bf16.msra.mxu0 %v323
    %475 = vmatmul.bf16.gmra.mxu0 %v110
    %v476 = vpop.f32.mrf.mxu0
    %v477 = vadd.f32 %v463, %v476
    %v478 = vpop.f32.mrf.mxu0
    %v479 = vadd.f32 %v465, %v478
    %480 = vdwg.mxu0
    %481 = vmatpush.bf16.msra.mxu0 %v409
    %482 = vmatpush.bf16.msra.mxu0 %v351
    %483 = vmatpush.bf16.msra.mxu0 %v349
    %484 = vmatpush.bf16.msra.mxu0 %v347
    %485 = vmatpush.bf16.msra.mxu0 %v345
    %486 = vmatpush.bf16.msra.mxu0 %v343
    %487 = vmatpush.bf16.msra.mxu0 %v341
    %488 = vmatpush.bf16.msra.mxu0 %v339
    %489 = vmatmul.bf16.gmra.mxu0 %v402
    %v490 = vpop.f32.mrf.mxu0
    %v491 = vadd.f32 %v477, %v490
    %v492 = vpop.f32.mrf.mxu0
    %v493 = vadd.f32 %v479, %v492
    %494 = vdwg.mxu0
    %v495 = vmax.f32 %v449, 0.0
    %v496 = vmax.f32 %v491, 0.0
    %v497 = vmax.f32 %v451, 0.0
    %v498 = vmax.f32 %v493, 0.0
    %v499 = vpack.c.bf16 %v497, %v495
    %v500 = vpack.c.bf16 %v498, %v496
    %v501 = vld [vmem:[#allocation8] sm:$0xf]
    %v502 = vld [vmem:[#allocation8 + $0x4] sm:$0xf]
    %v503 = vld [vmem:[#allocation8 + $0x8] sm:$0xf]
    %v504 = vld [vmem:[#allocation8 + $0xc] sm:$0xf]
    %v505 = vld [vmem:[#allocation8 + $0x10] sm:$0xf]
    %v506 = vld [vmem:[#allocation8 + $0x14] sm:$0xf]
    %v507 = vld [vmem:[#allocation8 + $0x18] sm:$0xf]
    %v508 = vld [vmem:[#allocation8 + $0x1c] sm:$0xf]
    %v509 = vld [vmem:[#allocation8 + $0x20] sm:$0xf]
    %v510 = vld [vmem:[#allocation8 + $0x24] sm:$0xf]
    %v511 = vld [vmem:[#allocation8 + $0x28] sm:$0xf]
    %v512 = vld [vmem:[#allocation8 + $0x2c] sm:$0xf]
    %v513 = vld [vmem:[#allocation8 + $0x30] sm:$0xf]
    %v514 = vld [vmem:[#allocation8 + $0x34] sm:$0xf]
    %v515 = vld [vmem:[#allocation8 + $0x38] sm:$0xf]
    %v516 = vld [vmem:[#allocation8 + $0x3c] sm:$0xf]
    %v517 = vld [vmem:[#allocation8 + $0x40] sm:$0xf]
    %v518 = vld [vmem:[#allocation8 + $0x44] sm:$0xf]
    %v519 = vld [vmem:[#allocation8 + $0x48] sm:$0xf]
    %v520 = vld [vmem:[#allocation8 + $0x4c] sm:$0xf]
    %v521 = vld [vmem:[#allocation8 + $0x50] sm:$0xf]
    %v522 = vld [vmem:[#allocation8 + $0x54] sm:$0xf]
    %v523 = vld [vmem:[#allocation8 + $0x58] sm:$0xf]
    %v524 = vld [vmem:[#allocation8 + $0x5c] sm:$0xf]
    %v525 = vld [vmem:[#allocation8 + $0x60] sm:$0xf]
    %v526 = vld [vmem:[#allocation8 + $0x64] sm:$0xf]
    %v527 = vld [vmem:[#allocation8 + $0x68] sm:$0xf]
    %v528 = vld [vmem:[#allocation8 + $0x6c] sm:$0xf]
    %v529 = vld [vmem:[#allocation8 + $0x70] sm:$0xf]
    %v530 = vld [vmem:[#allocation8 + $0x74] sm:$0xf]
    %v531 = vld [vmem:[#allocation8 + $0x78] sm:$0xf]
    %v532 = vld [vmem:[#allocation8 + $0x7c] sm:$0xf]
    %v533 = vld [vmem:[%s4] sm:$0x1]
    %v535 = vperm.slane %v533, 0
    %v569 = vunpack.c.l.b16 %v501
    %v570 = vunpack.c.l.b16 %v502
    %v571 = vunpack.c.l.b16 %v503
    %v572 = vunpack.c.l.b16 %v504
    %v573 = vunpack.c.l.b16 %v505
    %v574 = vunpack.c.l.b16 %v506
    %v575 = vunpack.c.l.b16 %v507
    %v576 = vunpack.c.l.b16 %v508
    %v577 = vunpack.c.l.b16 %v509
    %v578 = vunpack.c.l.b16 %v510
    %v579 = vunpack.c.l.b16 %v511
    %v580 = vunpack.c.l.b16 %v512
    %v581 = vunpack.c.l.b16 %v513
    %v582 = vunpack.c.l.b16 %v514
    %v583 = vunpack.c.l.b16 %v515
    %v584 = vunpack.c.l.b16 %v516
    %v585 = vunpack.c.l.b16 %v517
    %v586 = vunpack.c.l.b16 %v518
    %v587 = vunpack.c.l.b16 %v519
    %v588 = vunpack.c.l.b16 %v520
    %v589 = vunpack.c.l.b16 %v521
    %v590 = vunpack.c.l.b16 %v522
    %v591 = vunpack.c.l.b16 %v523
    %v592 = vunpack.c.l.b16 %v524
    %v593 = vunpack.c.l.b16 %v525
    %v594 = vunpack.c.l.b16 %v526
    %v595 = vunpack.c.l.b16 %v527
    %v596 = vunpack.c.l.b16 %v528
    %v597 = vunpack.c.l.b16 %v529
    %v598 = vunpack.c.l.b16 %v530
    %v599 = vunpack.c.l.b16 %v531
    %v600 = vunpack.c.l.b16 %v532
    %v601 = vpack.c.b16 %v570, %v569
    %v602 = vpack.c.b16 %v572, %v571
    %v603 = vpack.c.b16 %v574, %v573
    %v604 = vpack.c.b16 %v576, %v575
    %v605 = vpack.c.b16 %v578, %v577
    %v606 = vpack.c.b16 %v580, %v579
    %v607 = vpack.c.b16 %v582, %v581
    %v608 = vpack.c.b16 %v584, %v583
    %v609 = vpack.c.b16 %v586, %v585
    %v610 = vpack.c.b16 %v588, %v587
    %v611 = vpack.c.b16 %v590, %v589
    %v612 = vpack.c.b16 %v592, %v591
    %v613 = vpack.c.b16 %v594, %v593
    %v614 = vpack.c.b16 %v596, %v595
    %v615 = vpack.c.b16 %v598, %v597
    %v616 = vpack.c.b16 %v600, %v599
    %633 = vmatpush.bf16.msra.mxu0 %v608
    %634 = vmatpush.bf16.msra.mxu0 %v607
    %635 = vmatpush.bf16.msra.mxu0 %v606
    %636 = vmatpush.bf16.msra.mxu0 %v605
    %637 = vmatpush.bf16.msra.mxu0 %v604
    %638 = vmatpush.bf16.msra.mxu0 %v603
    %639 = vmatpush.bf16.msra.mxu0 %v602
    %640 = vmatpush.bf16.msra.mxu0 %v601
    %641 = vmatmul.bf16.gmra.mxu0 %v499
    %v642 = vpop.f32.mrf.mxu0
    %v643 = vadd.f32 %v535, %v642
    %v644 = vpop.f32.mrf.mxu0
    %v645 = vadd.f32 %v535, %v644
    %646 = vdwg.mxu0
    %647 = vmatpush.bf16.msra.mxu0 %v616
    %648 = vmatpush.bf16.msra.mxu0 %v615
    %649 = vmatpush.bf16.msra.mxu0 %v614
    %650 = vmatpush.bf16.msra.mxu0 %v613
    %651 = vmatpush.bf16.msra.mxu0 %v612
    %652 = vmatpush.bf16.msra.mxu0 %v611
    %653 = vmatpush.bf16.msra.mxu0 %v610
    %654 = vmatpush.bf16.msra.mxu0 %v609
    %655 = vmatmul.bf16.gmra.mxu0 %v500
    %v656 = vpop.f32.mrf.mxu0
    %v657 = vadd.f32 %v643, %v656
    %v658 = vpop.f32.mrf.mxu0
    %v659 = vadd.f32 %v645, %v658
    %660 = vdwg.mxu0
    %v661 = vmax.f32 %v657, 0.0
    %v662 = vmax.f32 %v659, 0.0
    %v663 = vpack.c.bf16 %v662, %v661
    %v664 = vld [vmem:[#allocation10] sm:$0xff]
    %v665 = vld [vmem:[#allocation10 + $0x8] sm:$0xff]
    %v666 = vld [vmem:[#allocation10 + $0x10] sm:$0xff]
    %v667 = vld [vmem:[#allocation10 + $0x18] sm:$0xff]
    %v668 = vld [vmem:[#allocation10 + $0x20] sm:$0xff]
    %v669 = vld [vmem:[#allocation10 + $0x28] sm:$0xff]
    %v670 = vld [vmem:[#allocation10 + $0x30] sm:$0xff]
    %v671 = vld [vmem:[#allocation10 + $0x38] sm:$0xff]
    %v672 = vld [vmem:[#allocation10 + $0x40] sm:$0xff]
    %v673 = vld [vmem:[#allocation10 + $0x48] sm:$0xff]
    %v674 = vld [vmem:[#allocation10 + $0x50] sm:$0xff]
    %v675 = vld [vmem:[#allocation10 + $0x58] sm:$0xff]
    %v676 = vld [vmem:[#allocation10 + $0x60] sm:$0xff]
    %v677 = vld [vmem:[#allocation10 + $0x68] sm:$0xff]
    %v678 = vld [vmem:[#allocation10 + $0x70] sm:$0xff]
    %v679 = vld [vmem:[#allocation10 + $0x78] sm:$0xff]
    %v680 = vld [vmem:[%s6] sm:$0x3]
    %v682 = vperm.slane %v680, 0
    %v683 = vperm.slane %v680, 1
    %v702 = vunpack.c.l.b16 %v664
    %v703 = vunpack.c.h.b16 %v664
    %v704 = vunpack.c.l.b16 %v665
    %v705 = vunpack.c.h.b16 %v665
    %v706 = vunpack.c.l.b16 %v666
    %v707 = vunpack.c.h.b16 %v666
    %v708 = vunpack.c.l.b16 %v667
    %v709 = vunpack.c.h.b16 %v667
    %v710 = vunpack.c.l.b16 %v668
    %v711 = vunpack.c.h.b16 %v668
    %v712 = vunpack.c.l.b16 %v669
    %v713 = vunpack.c.h.b16 %v669
    %v714 = vunpack.c.l.b16 %v670
    %v715 = vunpack.c.h.b16 %v670
    %v716 = vunpack.c.l.b16 %v671
    %v717 = vunpack.c.h.b16 %v671
    %v718 = vunpack.c.l.b16 %v672
    %v719 = vunpack.c.h.b16 %v672
    %v720 = vunpack.c.l.b16 %v673
    %v721 = vunpack.c.h.b16 %v673
    %v722 = vunpack.c.l.b16 %v674
    %v723 = vunpack.c.h.b16 %v674
    %v724 = vunpack.c.l.b16 %v675
    %v725 = vunpack.c.h.b16 %v675
    %v726 = vunpack.c.l.b16 %v676
    %v727 = vunpack.c.h.b16 %v676
    %v728 = vunpack.c.l.b16 %v677
    %v729 = vunpack.c.h.b16 %v677
    %v730 = vunpack.c.l.b16 %v678
    %v731 = vunpack.c.h.b16 %v678
    %v732 = vunpack.c.l.b16 %v679
    %v733 = vunpack.c.h.b16 %v679
    %v734 = vpack.c.b16 %v704, %v702
    %v735 = vpack.c.b16 %v705, %v703
    %v736 = vpack.c.b16 %v708, %v706
    %v737 = vpack.c.b16 %v709, %v707
    %v738 = vpack.c.b16 %v712, %v710
    %v739 = vpack.c.b16 %v713, %v711
    %v740 = vpack.c.b16 %v716, %v714
    %v741 = vpack.c.b16 %v717, %v715
    %v742 = vpack.c.b16 %v720, %v718
    %v743 = vpack.c.b16 %v721, %v719
    %v744 = vpack.c.b16 %v724, %v722
    %v745 = vpack.c.b16 %v725, %v723
    %v746 = vpack.c.b16 %v728, %v726
    %v747 = vpack.c.b16 %v729, %v727
    %v748 = vpack.c.b16 %v732, %v730
    %v749 = vpack.c.b16 %v733, %v731
    %766 = vmatpush.bf16.msra.mxu0 %v748
    %767 = vmatpush.bf16.msra.mxu0 %v746
    %768 = vmatpush.bf16.msra.mxu0 %v744
    %769 = vmatpush.bf16.msra.mxu0 %v742
    %770 = vmatpush.bf16.msra.mxu0 %v740
    %771 = vmatpush.bf16.msra.mxu0 %v738
    %772 = vmatpush.bf16.msra.mxu0 %v736
    %773 = vmatpush.bf16.msra.mxu0 %v734
    %774 = vmatmul.bf16.gmra.mxu0 %v663
    %v775 = vpop.f32.mrf.mxu0
    %v776 = vadd.f32 %v682, %v775
    %v777 = vpop.f32.mrf.mxu0
    %v778 = vadd.f32 %v682, %v777
    %779 = vdwg.mxu0
    %780 = vmatpush.bf16.msra.mxu0 %v749
    %781 = vmatpush.bf16.msra.mxu0 %v747
    %782 = vmatpush.bf16.msra.mxu0 %v745
    %783 = vmatpush.bf16.msra.mxu0 %v743
    %784 = vmatpush.bf16.msra.mxu0 %v741
    %785 = vmatpush.bf16.msra.mxu0 %v739
    %786 = vmatpush.bf16.msra.mxu0 %v737
    %787 = vmatpush.bf16.msra.mxu0 %v735
    %788 = vmatmul.bf16.gmra.mxu0 %v663
    %v789 = vpop.f32.mrf.mxu0
    %v790 = vadd.f32 %v683, %v789
    %v791 = vpop.f32.mrf.mxu0
    %v792 = vadd.f32 %v683, %v791
    %793 = vdwg.mxu0
    %v794 = vpack.c.bf16 %v790, %v776
    %v795 = vpack.c.bf16 %v792, %v778
    %796 = vst [vmem:[#allocation11] sm:$0xff] %v794
    %797 = vst [vmem:[#allocation11 + $0x8] sm:$0xff] %v795
    // Predicated region
    $region50: #{tpu_custom_call.1} parent=1 // pred_check
      _
    $region51: #{tpu_custom_call.1} parent=1 // pred_check_branch
      %799 = sbr.rel (0) target = $region53
    $region52: #{tpu_custom_call.1} parent=1 // pred_region
      %801 = vsyncadd [#allocation4], 0
      %s802 = sshll.u32 [#allocation11], 4
      %s803 = int_to_ptr.vmem [resolvable:$true] %s802
      %s804 = sshll.u32 %s7, 4
      %s805 = int_to_ptr.hbm [resolvable:$true] %s804
      %810 = dma.vmem_to_hbm [thread:$0]  %s803, 256, %s805, [#allocation4], 128, 128, 8
    $region53: #{tpu_custom_call.1} parent=1 // pred_fallthru
      _
    // Predicated region
    $region54: #{tpu_custom_call.1} parent=1 // pred_check
      _
    $region55: #{tpu_custom_call.1} parent=1 // pred_check_branch
      %812 = sbr.rel (0) target = $region57
    $region56: #{tpu_custom_call.1} parent=1 // pred_region
      %814 = dma.done [#allocation4], 256
    $region57: #{tpu_custom_call.1} parent=1 // pred_fallthru
      _
    %815 = vsyncpa [#allocation3], 1
    %816 = vsyncpa [#allocation6], 1
    %817 = vsyncpa [#allocation9], 1
    %818 = vsyncpa [#allocation4], 1

</llo_original>
